<compile_context>
chip_gen: v7x
topology: tpu7x:2x2x1
jax: 0.10.0
libtpu: 0.0.40
codegen_flags: <defaults>
</compile_context>

<pallas_src>
import functools

import jax
import jax.numpy as jnp
from jax.experimental import pallas as pl
from jax.experimental.pallas import tpu as pltpu

# Lane-dense tile: 512 x 1024 f32 = 2 MiB per block.
_COLS = 1024
_TILE_R = 512


def _binary_mask_kernel(mag_ref, out_ref, *, threshold):
    # Elementwise hot path: (magnitude > threshold).float()
    out_ref[...] = (mag_ref[...] > threshold).astype(out_ref.dtype)


def binary_mask(magnitude: jax.Array, threshold: float = 0.5) -> jax.Array:
    """Pallas implementation of BinaryMask.forward.

    magnitude: any-shaped float array (e.g. NCHW). Returns float32 mask, same shape.
    """
    orig_shape = magnitude.shape
    n = int(magnitude.size)
    flat = magnitude.reshape(-1)

    # Lane-dense re-flatten: pad flat size so it reshapes to (rows, _COLS) with rows
    # either a multiple of _TILE_R (big inputs) or a single >=8-row block (small inputs).
    rows_needed = pl.cdiv(n, _COLS)
    if rows_needed <= _TILE_R:
        tile_r = max(8, pl.cdiv(rows_needed, 8) * 8)  # one block, sublane-aligned
        rows = tile_r
    else:
        tile_r = _TILE_R
        rows = pl.cdiv(rows_needed, _TILE_R) * _TILE_R

    padded = rows * _COLS
    if padded != n:
        flat = jnp.pad(flat, (0, padded - n))
    x2d = flat.reshape(rows, _COLS)

    grid_r = rows // tile_r
    kernel = functools.partial(_binary_mask_kernel, threshold=float(threshold))

    out2d = pl.pallas_call(
        kernel,
        out_shape=jax.ShapeDtypeStruct((rows, _COLS), jnp.float32),
        grid_spec=pl.GridSpec(
            grid=(grid_r,),
            in_specs=[pl.BlockSpec((tile_r, _COLS), lambda i: (i, 0))],
            out_specs=pl.BlockSpec((tile_r, _COLS), lambda i: (i, 0)),
        ),
        compiler_params=pltpu.CompilerParams(
            # Independent tiles: shard across both TensorCores on v7x.
            dimension_semantics=("parallel",),
        ),
    )(x2d)

    return out2d.reshape(-1)[:n].reshape(orig_shape)


if __name__ == "__main__":
    key = jax.random.PRNGKey(0)
    # Small NCHW magnitude tensor, values in [0, 1) so threshold=0.5 splits it.
    x = jax.random.uniform(key, (2, 4, 16, 16), dtype=jnp.float32)

    mask = binary_mask(x, threshold=0.5)
    mask = jax.block_until_ready(mask)

    # Reference check in plain JAX.
    ref = (x > 0.5).astype(jnp.float32)
    assert mask.shape == x.shape
    assert mask.dtype == jnp.float32
    assert bool(jnp.all(mask == ref))

    print("KERNEL_OK")
</pallas_src>

<mosaic_0001>
module attributes {stable_mosaic.version = 11 : i64} {
  func.func @_binary_mask_kernel(%arg0: i32, %arg1: memref<8x1024xf32, #tpu.memory_space<vmem>>, %arg2: memref<8x1024xf32, #tpu.memory_space<vmem>>) attributes {dimension_semantics = [#tpu.dimension_semantics<parallel>], iteration_bounds = array<i64: 1>, scalar_prefetch = 0 : i64, scratch_operands = 0 : i64, tpu.core_type = #tpu.core_type<tc>, window_params = [{transform_indices = @transform_0, window_bounds = array<i64: 8, 1024>}, {transform_indices = @transform_1, window_bounds = array<i64: 8, 1024>}]} {
    %c0 = arith.constant 0 : index
    %c0_0 = arith.constant 0 : index
    %0 = vector.load %arg1[%c0, %c0_0] : memref<8x1024xf32, #tpu.memory_space<vmem>>, vector<8x1024xf32>
    %cst = arith.constant 5.000000e-01 : f32
    %1 = vector.broadcast %cst : f32 to vector<8x1024xf32>
    %2 = arith.cmpf ogt, %0, %1 : vector<8x1024xf32>
    %3 = arith.extui %2 : vector<8x1024xi1> to vector<8x1024xi32>
    %4 = arith.sitofp %3 : vector<8x1024xi32> to vector<8x1024xf32>
    %c0_1 = arith.constant 0 : index
    %c0_2 = arith.constant 0 : index
    %5 = vector.load %arg2[%c0_1, %c0_2] : memref<8x1024xf32, #tpu.memory_space<vmem>>, vector<8x1024xf32>
    tpu.vector_store %arg2[%c0_1, %c0_2], %4 {strides = array<i32>} : memref<8x1024xf32, #tpu.memory_space<vmem>>, vector<8x1024xf32>,
    return
  }
  func.func @transform_0(%arg0: i32) -> (i32, i32) {
    %c0_i32 = arith.constant 0 : i32
    %c0_i32_0 = arith.constant 0 : i32
    return %arg0, %c0_i32 : i32, i32
  }
  func.func @transform_1(%arg0: i32) -> (i32, i32) {
    %c0_i32 = arith.constant 0 : i32
    %c0_i32_0 = arith.constant 0 : i32
    return %arg0, %c0_i32 : i32, i32
  }
}

</mosaic_0001>

<llo_original>
// kernel: tpu_custom_call.1
$region0: #{tpu_custom_call.1}
  #allocation0 [shape = 'u32[]', space=smem, size = 0x4, offset = 0x4, fixed_abs, tag = 'smem constant byte address 0x4 - core index']
  #allocation1 [shape = 'u32[144,128]{1,0:T(1,128)}', space=vmem, size = 0x12000, scoped, tag = 'internal scratch']
  %s0 = inlined_call_operand.hbm [shape: f32[8,1024], index: 0, kind: input, shape index: {}]
  %s1 = inlined_call_operand.hbm [shape: f32[8,1024], index: 1, kind: output, shape index: {}]
  %s2 = sld [smem:[#allocation0]]
  $region18: #{tpu_custom_call.1} parent=0
    _
  %s4 = ssub.s32 1, %s2
  %s5 = scalar_select 0, %s4, %s2
  $region1: #{tpu_custom_call.1} parent=0
    #allocation2 [shape = 'u8[32768]{0}', space=vmem, size = 0x8000, scoped, tag = 'input window, operand 0, single buffered']
    #allocation3 [shape = 's32[1]{0}', space=sflag, size = 0x4, scoped, tag = 'scoped memory for tpu_custom_call.1']
    #allocation4 [shape = 's32[1]{0}', space=sflag, size = 0x4, scoped, tag = 'scoped memory for tpu_custom_call.1']
    #allocation5 [shape = 'u8[32768]{0}', space=vmem, size = 0x8000, scoped, tag = 'output window, operand 0, single buffered']
    %6 = vsyncpa [#allocation3], 0
    %7 = vsyncpa [#allocation4], 0
    // Predicated region
    $region2: #{tpu_custom_call.1} parent=1 // pred_check
      _
    $region3: #{tpu_custom_call.1} parent=1 // pred_check_branch
      %9 = sbr.rel (0) target = $region5
    $region4: #{tpu_custom_call.1} parent=1 // pred_region
      %s11 = ssub.s32 1024, 1024
      %12 = vsyncadd [#allocation3], %s11
      %s14 = sshll.u32 [#allocation2], 4
      %s15 = int_to_ptr.vmem [resolvable:$true] %s14
      %17 = dma.hbm_to_vmem [thread:$0]  %s0, 1024, %s15, [#allocation3]
    $region5: #{tpu_custom_call.1} parent=1 // pred_fallthru
      _
    // Predicated region
    $region6: #{tpu_custom_call.1} parent=1 // pred_check
      _
    $region7: #{tpu_custom_call.1} parent=1 // pred_check_branch
      %19 = sbr.rel (0) target = $region9
    $region8: #{tpu_custom_call.1} parent=1 // pred_region
      %20 = dma.done [#allocation3], 1024
    $region9: #{tpu_custom_call.1} parent=1 // pred_fallthru
      _
    %v21 = vld [vmem:[#allocation2] sm:$0xff]
    %v22 = vld [vmem:[#allocation2 + $0x8] sm:$0xff]
    %v23 = vld [vmem:[#allocation2 + $0x10] sm:$0xff]
    %v24 = vld [vmem:[#allocation2 + $0x18] sm:$0xff]
    %v25 = vld [vmem:[#allocation2 + $0x20] sm:$0xff]
    %v26 = vld [vmem:[#allocation2 + $0x28] sm:$0xff]
    %v27 = vld [vmem:[#allocation2 + $0x30] sm:$0xff]
    %v28 = vld [vmem:[#allocation2 + $0x38] sm:$0xff]
    %vm29 = vcmp.gt.f32.partialorder %v21, 0.5
    %vm30 = vcmp.gt.f32.partialorder %v22, 0.5
    %vm31 = vcmp.gt.f32.partialorder %v23, 0.5
    %vm32 = vcmp.gt.f32.partialorder %v24, 0.5
    %vm33 = vcmp.gt.f32.partialorder %v25, 0.5
    %vm34 = vcmp.gt.f32.partialorder %v26, 0.5
    %vm35 = vcmp.gt.f32.partialorder %v27, 0.5
    %vm36 = vcmp.gt.f32.partialorder %v28, 0.5
    %v37 = vsel %vm29, 1, 0
    %v38 = vsel %vm30, 1, 0
    %v39 = vsel %vm31, 1, 0
    %v40 = vsel %vm32, 1, 0
    %v41 = vsel %vm33, 1, 0
    %v42 = vsel %vm34, 1, 0
    %v43 = vsel %vm35, 1, 0
    %v44 = vsel %vm36, 1, 0
    %v45 = vcvt.s32.f32 %v37
    %v46 = vcvt.s32.f32 %v38
    %v47 = vcvt.s32.f32 %v39
    %v48 = vcvt.s32.f32 %v40
    %v49 = vcvt.s32.f32 %v41
    %v50 = vcvt.s32.f32 %v42
    %v51 = vcvt.s32.f32 %v43
    %v52 = vcvt.s32.f32 %v44
    %53 = vst [vmem:[#allocation5] sm:$0xff] %v45
    %54 = vst [vmem:[#allocation5 + $0x8] sm:$0xff] %v46
    %55 = vst [vmem:[#allocation5 + $0x10] sm:$0xff] %v47
    %56 = vst [vmem:[#allocation5 + $0x18] sm:$0xff] %v48
    %57 = vst [vmem:[#allocation5 + $0x20] sm:$0xff] %v49
    %58 = vst [vmem:[#allocation5 + $0x28] sm:$0xff] %v50
    %59 = vst [vmem:[#allocation5 + $0x30] sm:$0xff] %v51
    %60 = vst [vmem:[#allocation5 + $0x38] sm:$0xff] %v52
    // Predicated region
    $region10: #{tpu_custom_call.1} parent=1 // pred_check
      _
    $region11: #{tpu_custom_call.1} parent=1 // pred_check_branch
      %62 = sbr.rel (0) target = $region13
    $region12: #{tpu_custom_call.1} parent=1 // pred_region
      %s64 = ssub.s32 1024, 1024
      %65 = vsyncadd [#allocation4], %s64
      %s67 = sshll.u32 [#allocation5], 4
      %s68 = int_to_ptr.vmem [resolvable:$true] %s67
      %70 = dma.vmem_to_hbm [thread:$0]  %s68, 1024, %s1, [#allocation4]
    $region13: #{tpu_custom_call.1} parent=1 // pred_fallthru
      _
    // Predicated region
    $region14: #{tpu_custom_call.1} parent=1 // pred_check
      _
    $region15: #{tpu_custom_call.1} parent=1 // pred_check_branch
      %72 = sbr.rel (0) target = $region17
    $region16: #{tpu_custom_call.1} parent=1 // pred_region
      %73 = dma.done [#allocation4], 1024
    $region17: #{tpu_custom_call.1} parent=1 // pred_fallthru
      _
    %74 = vsyncpa [#allocation3], 1
    %75 = vsyncpa [#allocation4], 1

</llo_original>
